<compile_context>
chip_gen: v5e
topology: v5e:2x2
jax: 0.10.0
libtpu: 0.0.40
codegen_flags: <defaults>
</compile_context>

<pallas_src>
import functools

import jax
import jax.numpy as jnp
from jax.experimental import pallas as pl
from jax.experimental.pallas import tpu as pltpu


def _rmsnorm_kernel(x_ref, scale_ref, o_ref, *, eps: float, chunk_rows: int):
    # x_ref/o_ref: (row_tile, H) block; scale_ref: (1, H) f32, VMEM-resident.
    s = scale_ref[...]                                   # (1, H), already f32
    row_tile = x_ref.shape[0]
    n_chunks = row_tile // chunk_rows                    # exact by construction

    def chunk_body(c, carry):
        r = pl.multiple_of(c * chunk_rows, chunk_rows)   # aligned sublane slice
        x = x_ref[pl.ds(r, chunk_rows), :].astype(jnp.float32)
        var = jnp.mean(x * x, axis=-1, keepdims=True)    # per-row mean of squares
        inv = jax.lax.rsqrt(var + eps)                   # EUP rsqrt
        o_ref[pl.ds(r, chunk_rows), :] = (x * inv * s).astype(o_ref.dtype)
        return carry

    if n_chunks == 1:
        chunk_body(0, 0)
    else:
        jax.lax.fori_loop(0, n_chunks, chunk_body, 0,
                          unroll=True if n_chunks <= 8 else False)


def _round_down(x: int, m: int) -> int:
    return (x // m) * m


def _choose_row_tile(rows: int, hidden: int, itemsize: int) -> int:
    """Row tile giving few-MiB blocks and enough grid steps to pipeline."""
    # Sublane packing granule: f32 -> 8 rows/vreg, bf16 -> 16, int8/fp8 -> 32.
    pack = max(8, 8 * (4 // max(1, itemsize)))
    if rows <= pack:
        return rows  # single full-extent block (full-dim rule covers odd rows)

    # Few-MiB input block: measured tiled mem-bound kernels reach ~85% of HBM
    # roofline there; many double-buffered steps beat 2 giant serialized ones.
    target_block_bytes = 2 << 20
    tile = max(pack, target_block_bytes // max(1, hidden * itemsize))
    tile = min(tile, 1024)

    # Aim for >= 8 grid steps (>= 4 per TC on v7x megacore) when rows allow.
    if rows >= 8 * pack:
        tile = min(tile, max(pack, pl.cdiv(rows, 8)))

    tile = _round_down(tile, pack)
    tile = min(tile, _round_down(rows, pack))
    return max(tile, pack)


def rmsnorm_pallas(hidden_states: jnp.ndarray,
                   scale=None,
                   eps: float = 1e-5,
                   row_tile: int | None = None) -> jnp.ndarray:
    """RMSNorm forward. hidden_states: (..., H); scale: (H,) or scalar/None."""
    orig_shape = hidden_states.shape
    orig_dtype = hidden_states.dtype
    H = orig_shape[-1]

    x2d = hidden_states.reshape(-1, H)
    R = x2d.shape[0]

    # create_scale=False in the PyTorch module -> scale is a plain scalar (1.0).
    if scale is None or not hasattr(scale, "ndim") or getattr(scale, "ndim", 0) == 0:
        scale_val = 1.0 if scale is None else scale
        scale2d = jnp.full((1, H), scale_val, dtype=jnp.float32)
    else:
        scale2d = scale.astype(jnp.float32).reshape(1, H)   # f32 once, in wrapper

    itemsize = jnp.dtype(orig_dtype).itemsize
    pack = max(8, 8 * (4 // max(1, itemsize)))
    if row_tile is None:
        row_tile = _choose_row_tile(R, H, itemsize)
    chunk_rows = pack if (row_tile % pack == 0) else row_tile

    # Ragged last block (R not a multiple of row_tile): OOB input rows read
    # garbage (strictly per-row math, never contaminates valid rows) and OOB
    # output writes are dropped by the masked boundary store. No jnp.pad.
    grid = (pl.cdiv(R, row_tile),)

    # Scoped-VMEM budget: double-buffered in+out blocks + resident scale +
    # slack. Floor 32 MiB (v5e default is only 16 MiB), cap 40 MiB so it fits
    # comfortably inside v7x's 64 MiB per-TC VMEM.
    blk_bytes = row_tile * H * itemsize
    vmem_estimate = 4 * blk_bytes + 2 * H * 4 + (4 << 20)
    vmem_limit = int(min(40 << 20, max(32 << 20, vmem_estimate)))

    out = pl.pallas_call(
        functools.partial(_rmsnorm_kernel, eps=eps, chunk_rows=chunk_rows),
        out_shape=jax.ShapeDtypeStruct((R, H), orig_dtype),
        grid=grid,
        in_specs=[
            pl.BlockSpec((row_tile, H), lambda i: (i, 0)),
            pl.BlockSpec((1, H), lambda i: (0, 0)),        # VMEM-resident scale
        ],
        out_specs=pl.BlockSpec((row_tile, H), lambda i: (i, 0)),
        compiler_params=pltpu.CompilerParams(
            dimension_semantics=("parallel",),             # megacore row split
            vmem_limit_bytes=vmem_limit),
    )(x2d, scale2d)

    return out.reshape(orig_shape)


def rmsnorm_reference(hidden_states: jnp.ndarray,
                      scale: jnp.ndarray,
                      eps: float = 1e-5) -> jnp.ndarray:
    input_dtype = hidden_states.dtype
    x = hidden_states.astype(jnp.float32)
    variance = jnp.mean(x * x, axis=-1, keepdims=True)
    x = x * jax.lax.rsqrt(variance + eps)
    x = scale.astype(jnp.float32) * x
    return x.astype(input_dtype)


if __name__ == "__main__":
    key = jax.random.PRNGKey(0)
    eps = 1e-5

    # (batch, seq, hidden) cases: divisible rows, ragged rows (exercises the
    # no-pad masked last block), and a packed-dtype (bf16) path.
    cases = [
        ((2, 8, 32), jnp.float32),
        ((3, 7, 32), jnp.float32),
        ((2, 8, 32), jnp.bfloat16),
    ]

    for shape, dtype in cases:
        kx, ks, key = jax.random.split(key, 3)
        x = jax.random.normal(kx, shape, dtype=jnp.float32).astype(dtype)
        # Grok-1's __init__ uses torch.zeros(hidden_size); use a deterministic
        # nonzero init so the compute path is actually exercised.
        scale = jax.random.normal(ks, (shape[-1],), dtype=jnp.float32)

        out = jax.block_until_ready(rmsnorm_pallas(x, scale, eps=eps))
        ref = rmsnorm_reference(x, scale, eps=eps)

        assert out.shape == x.shape and out.dtype == x.dtype
        tol = 1e-5 if dtype == jnp.float32 else 2e-2
        assert jnp.allclose(out.astype(jnp.float32), ref.astype(jnp.float32),
                            atol=tol, rtol=tol), f"mismatch vs reference {shape} {dtype}"

    print("KERNEL_OK")
</pallas_src>

<mosaic_0001>
module attributes {stable_mosaic.version = 11 : i64} {
  func.func @_rmsnorm_kernel(%arg0: i32, %arg1: memref<16x32xf32, #tpu.memory_space<vmem>>, %arg2: memref<1x32xf32, #tpu.memory_space<vmem>>, %arg3: memref<16x32xf32, #tpu.memory_space<vmem>>) attributes {dimension_semantics = [#tpu.dimension_semantics<parallel>], iteration_bounds = array<i64: 1>, scalar_prefetch = 0 : i64, scratch_operands = 0 : i64, tpu.core_type = #tpu.core_type<tc>, window_params = [{transform_indices = @transform_0, window_bounds = array<i64: 16, 32>}, {pipeline_mode = #tpu.pipeline_mode<synchronous>, transform_indices = @transform_1, window_bounds = array<i64: 1, 32>}, {transform_indices = @transform_2, window_bounds = array<i64: 16, 32>}]} {
    %c0 = arith.constant 0 : index
    %c0_0 = arith.constant 0 : index
    %0 = vector.load %arg2[%c0, %c0_0] : memref<1x32xf32, #tpu.memory_space<vmem>>, vector<1x32xf32>
    %c0_i32 = arith.constant 0 : i32
    %c8_i32 = arith.constant 8 : i32
    %1 = arith.muli %c0_i32, %c8_i32 : i32
    %2 = tpu.assume_multiple %1, 8 : i32
    %3 = arith.index_cast %2 : i32 to index
    %c0_1 = arith.constant 0 : index
    %4 = vector.load %arg1[%3, %c0_1] : memref<16x32xf32, #tpu.memory_space<vmem>>, vector<8x32xf32>
    %5 = arith.mulf %4, %4 : vector<8x32xf32>
    %cst = arith.constant dense<0.000000e+00> : vector<8xf32>
    %6 = vector.multi_reduction <add>, %5, %cst [1] : vector<8x32xf32> to vector<8xf32>
    %7 = vector.shape_cast %6 : vector<8xf32> to vector<8x1xf32>
    %cst_2 = arith.constant 3.200000e+01 : f32
    %8 = vector.broadcast %cst_2 : f32 to vector<8x1xf32>
    %9 = arith.divf %7, %8 : vector<8x1xf32>
    %cst_3 = arith.constant 9.99999974E-6 : f32
    %10 = vector.broadcast %cst_3 : f32 to vector<8x1xf32>
    %11 = arith.addf %9, %10 : vector<8x1xf32>
    %12 = math.rsqrt %11 : vector<8x1xf32>
    %13 = vector.broadcast %12 : vector<8x1xf32> to vector<8x32xf32>
    %14 = arith.mulf %4, %13 : vector<8x32xf32>
    %15 = vector.broadcast %0 : vector<1x32xf32> to vector<8x32xf32>
    %16 = arith.mulf %14, %15 : vector<8x32xf32>
    %17 = arith.index_cast %2 : i32 to index
    %c0_4 = arith.constant 0 : index
    %18 = vector.load %arg3[%17, %c0_4] : memref<16x32xf32, #tpu.memory_space<vmem>>, vector<8x32xf32>
    tpu.vector_store %arg3[%17, %c0_4], %16 {strides = array<i32>} : memref<16x32xf32, #tpu.memory_space<vmem>>, vector<8x32xf32>,
    %c1_i32 = arith.constant 1 : i32
    %c8_i32_5 = arith.constant 8 : i32
    %19 = arith.muli %c1_i32, %c8_i32_5 : i32
    %20 = tpu.assume_multiple %19, 8 : i32
    %21 = arith.index_cast %20 : i32 to index
    %c0_6 = arith.constant 0 : index
    %22 = vector.load %arg1[%21, %c0_6] : memref<16x32xf32, #tpu.memory_space<vmem>>, vector<8x32xf32>
    %23 = arith.mulf %22, %22 : vector<8x32xf32>
    %cst_7 = arith.constant dense<0.000000e+00> : vector<8xf32>
    %24 = vector.multi_reduction <add>, %23, %cst_7 [1] : vector<8x32xf32> to vector<8xf32>
    %25 = vector.shape_cast %24 : vector<8xf32> to vector<8x1xf32>
    %cst_8 = arith.constant 3.200000e+01 : f32
    %26 = vector.broadcast %cst_8 : f32 to vector<8x1xf32>
    %27 = arith.divf %25, %26 : vector<8x1xf32>
    %cst_9 = arith.constant 9.99999974E-6 : f32
    %28 = vector.broadcast %cst_9 : f32 to vector<8x1xf32>
    %29 = arith.addf %27, %28 : vector<8x1xf32>
    %30 = math.rsqrt %29 : vector<8x1xf32>
    %31 = vector.broadcast %30 : vector<8x1xf32> to vector<8x32xf32>
    %32 = arith.mulf %22, %31 : vector<8x32xf32>
    %33 = vector.broadcast %0 : vector<1x32xf32> to vector<8x32xf32>
    %34 = arith.mulf %32, %33 : vector<8x32xf32>
    %35 = arith.index_cast %20 : i32 to index
    %c0_10 = arith.constant 0 : index
    %36 = vector.load %arg3[%35, %c0_10] : memref<16x32xf32, #tpu.memory_space<vmem>>, vector<8x32xf32>
    tpu.vector_store %arg3[%35, %c0_10], %34 {strides = array<i32>} : memref<16x32xf32, #tpu.memory_space<vmem>>, vector<8x32xf32>,
    %c2_i32 = arith.constant 2 : i32
    return
  }
  func.func @transform_0(%arg0: i32) -> (i32, i32) {
    %c0_i32 = arith.constant 0 : i32
    %c0_i32_0 = arith.constant 0 : i32
    return %arg0, %c0_i32 : i32, i32
  }
  func.func @transform_1(%arg0: i32) -> (i32, i32) {
    %c0_i32 = arith.constant 0 : i32
    %c0_i32_0 = arith.constant 0 : i32
    %c0_i32_1 = arith.constant 0 : i32
    return %c0_i32, %c0_i32_0 : i32, i32
  }
  func.func @transform_2(%arg0: i32) -> (i32, i32) {
    %c0_i32 = arith.constant 0 : i32
    %c0_i32_0 = arith.constant 0 : i32
    return %arg0, %c0_i32 : i32, i32
  }
}

</mosaic_0001>

<llo_original>
// kernel: tpu_custom_call.1
$region0: #{tpu_custom_call.1}
  #allocation0 [shape = 'u32[]', space=smem, size = 0x4, offset = 0x4, fixed_abs, tag = 'smem constant byte address 0x4 - core index']
  #allocation1 [shape = 'u32[72,128]{1,0:T(1,128)}', space=vmem, size = 0x9000, scoped, tag = 'internal scratch']
  %s0 = inlined_call_operand.hbm [shape: f32[16,32], index: 0, kind: input, shape index: {}]
  %s1 = inlined_call_operand.hbm [shape: f32[1,32], index: 1, kind: input, shape index: {}]
  %s2 = inlined_call_operand.hbm [shape: f32[16,32], index: 2, kind: output, shape index: {}]
  %s3 = sld [smem:[#allocation0]]
  $region26: #{tpu_custom_call.1} parent=0
    _
  %s5 = ssub.s32 1, %s3
  %s6 = scalar_select 0, %s5, %s3
  $region1: #{tpu_custom_call.1} parent=0
    #allocation2 [shape = 'u8[8192]{0}', space=vmem, size = 0x2000, scoped, tag = 'input window, operand 0, single buffered']
    #allocation3 [shape = 's32[1]{0}', space=sflag, size = 0x4, scoped, tag = 'scoped memory for tpu_custom_call.1']
    #allocation4 [shape = 's32[1]{0}', space=sflag, size = 0x4, scoped, tag = 'scoped memory for tpu_custom_call.1']
    #allocation5 [shape = 'u8[512]{0}', space=vmem, size = 0x400, scoped, tag = 'input window, operand 1, single buffered']
    #allocation6 [shape = 's32[1]{0}', space=sflag, size = 0x4, scoped, tag = 'scoped memory for tpu_custom_call.1']
    #allocation7 [shape = 'u8[8192]{0}', space=vmem, size = 0x2000, scoped, tag = 'output window, operand 0, single buffered']
    %7 = vsyncpa [#allocation3], 0
    %8 = vsyncpa [#allocation6], 0
    %9 = vsyncpa [#allocation4], 0
    // Predicated region
    $region2: #{tpu_custom_call.1} parent=1 // pred_check
      _
    $region3: #{tpu_custom_call.1} parent=1 // pred_check_branch
      %11 = sbr.rel (0) target = $region5
    $region4: #{tpu_custom_call.1} parent=1 // pred_region
      %13 = vsyncadd [#allocation3], 0
      %s14 = sshll.u32 %s0, 4
      %s15 = int_to_ptr.hbm [resolvable:$true] %s14
      %s16 = sshll.u32 [#allocation2], 4
      %s17 = int_to_ptr.vmem [resolvable:$true] %s16
      %22 = dma.hbm_to_vmem [thread:$0]  %s15, 256, %s17, [#allocation3], 128, 128, 8
    $region5: #{tpu_custom_call.1} parent=1 // pred_fallthru
      _
    // Predicated region
    $region6: #{tpu_custom_call.1} parent=1 // pred_check
      _
    $region7: #{tpu_custom_call.1} parent=1 // pred_check_branch
      %24 = sbr.rel (0) target = $region9
    $region8: #{tpu_custom_call.1} parent=1 // pred_region
      %26 = vsyncadd [#allocation6], 0
      %s28 = sshll.u32 %s1, 4
      %s29 = int_to_ptr.hbm [resolvable:$true] %s28
      %s30 = sshll.u32 [#allocation5], 4
      %s31 = int_to_ptr.vmem [resolvable:$true] %s30
      %33 = dma.hbm_to_vmem [thread:$0]  %s29, 16, %s31, [#allocation6]
    $region9: #{tpu_custom_call.1} parent=1 // pred_fallthru
      _
    // Predicated region
    $region10: #{tpu_custom_call.1} parent=1 // pred_check
      _
    $region11: #{tpu_custom_call.1} parent=1 // pred_check_branch
      %35 = sbr.rel (0) target = $region13
    $region12: #{tpu_custom_call.1} parent=1 // pred_region
      %37 = dma.done [#allocation3], 256
    $region13: #{tpu_custom_call.1} parent=1 // pred_fallthru
      _
    // Predicated region
    $region14: #{tpu_custom_call.1} parent=1 // pred_check
      _
    $region15: #{tpu_custom_call.1} parent=1 // pred_check_branch
      %39 = sbr.rel (0) target = $region17
    $region16: #{tpu_custom_call.1} parent=1 // pred_region
      %41 = dma.done [#allocation6], 16
    $region17: #{tpu_custom_call.1} parent=1 // pred_fallthru
      _
    %v42 = vld [vmem:[#allocation5] sm:$0x1]
    %v43 = vld [vmem:[#allocation2] sm:$0xff]
    %v44 = vmul.f32 %v43, %v43
    %vm45 = vcmask 261120
    %v46 = vsel %vm45, %v44, 0.0
    %47 = vadd.xlane.f32.xlu0 %v46
    %v48 = vpop.xlane.xlu0 %47
    %v49 = vrcp.pop 32.0
    %v50 = vmul.f32 32.0, %v49
    %v51 = vsub.f32 1.0, %v50
    %v52 = vmul.f32 %v49, %v51
    %v53 = vadd.f32 %v49, %v52
    %vm54 = vweird.f32 %v49
    %v55 = vsel %vm54, %v49, %v53
    %v56 = vmul.f32 %v48, %v55
    %v57 = vadd.f32 %v56, 1e-05
    %v58 = vrsqrt.pop %v57
    %v59 = vmul.f32 %v58, %v57
    %v60 = vmul.f32 %v59, %v58
    %v61 = vmul.f32 0.5, %v60
    %v62 = vsub.f32 1.5, %v61
    %v63 = vmul.f32 %v58, %v62
    %vm64 = vweird.f32 %v57
    %vm65 = vweird.f32 %v58
    %vm66 = vmor %vm64, %vm65
    %v67 = vsel %vm66, %v58, %v63
    %v68 = vmul.f32 %v43, %v67
    %v70 = vperm.slane %v42, 0
    %v72 = vmul.f32 %v68, %v70
    %73 = vst.msk [vmem:[#allocation7] sm:$0xff] %vm45, %v72
    %s74 = scalar_lea.vmem [#allocation2], 8
    %v75 = vld [vmem:[%s74] sm:$0xff]
    %v76 = vmul.f32 %v75, %v75
    %v77 = vsel %vm45, %v76, 0.0
    %78 = vadd.xlane.f32.xlu0 %v77
    %v79 = vpop.xlane.xlu0 %78
    %v80 = vmul.f32 %v79, %v55
    %v81 = vadd.f32 %v80, 1e-05
    %v82 = vrsqrt.pop %v81
    %v83 = vmul.f32 %v82, %v81
    %v84 = vmul.f32 %v83, %v82
    %v85 = vmul.f32 0.5, %v84
    %v86 = vsub.f32 1.5, %v85
    %v87 = vmul.f32 %v82, %v86
    %vm88 = vweird.f32 %v81
    %vm89 = vweird.f32 %v82
    %vm90 = vmor %vm88, %vm89
    %v91 = vsel %vm90, %v82, %v87
    %v92 = vmul.f32 %v75, %v91
    %v93 = vmul.f32 %v92, %v70
    %s94 = scalar_lea.vmem [#allocation7], 8
    %95 = vst.msk [vmem:[%s94] sm:$0xff] %vm45, %v93
    // Predicated region
    $region18: #{tpu_custom_call.1} parent=1 // pred_check
      _
    $region19: #{tpu_custom_call.1} parent=1 // pred_check_branch
      %97 = sbr.rel (0) target = $region21
    $region20: #{tpu_custom_call.1} parent=1 // pred_region
      %99 = vsyncadd [#allocation4], 0
      %s100 = sshll.u32 [#allocation7], 4
      %s101 = int_to_ptr.vmem [resolvable:$true] %s100
      %s102 = sshll.u32 %s2, 4
      %s103 = int_to_ptr.hbm [resolvable:$true] %s102
      %108 = dma.vmem_to_hbm [thread:$0]  %s101, 256, %s103, [#allocation4], 128, 128, 8
    $region21: #{tpu_custom_call.1} parent=1 // pred_fallthru
      _
    // Predicated region
    $region22: #{tpu_custom_call.1} parent=1 // pred_check
      _
    $region23: #{tpu_custom_call.1} parent=1 // pred_check_branch
      %110 = sbr.rel (0) target = $region25
    $region24: #{tpu_custom_call.1} parent=1 // pred_region
      %112 = dma.done [#allocation4], 256
    $region25: #{tpu_custom_call.1} parent=1 // pred_fallthru
      _
    %113 = vsyncpa [#allocation3], 1
    %114 = vsyncpa [#allocation6], 1
    %115 = vsyncpa [#allocation4], 1

</llo_original>
